<compile_context>
chip_gen: v5e
topology: v5e:2x2
jax: 0.10.0
libtpu: 0.0.40
codegen_flags: <defaults>
</compile_context>

<pallas_src>
import functools
import math

import jax
import jax.numpy as jnp
from jax import lax
from jax.experimental import pallas as pl
from jax.experimental.pallas import tpu as pltpu


def _mha_kernel(q_ref, k_ref, v_ref, wqkv_ref, bqkv_ref, wo_ref, bo_ref,
                headmask_ref, gsum_ref, out_ref, *, head_num, compute_dtype):
    """Fused multi-head attention for a (Bt, L, C) batch tile.

    Refs (VMEM tiles):
      q_ref       : (Bt, Lq, Cq)       k_ref / v_ref : (Bt, Lk, Ck)
      wqkv_ref    : (3, Cmax, HD)   rows = [Wq (1/temp folded), Wk, Wv], (in, out) layout
      bqkv_ref    : (3, HD)         rows = [bq (1/temp folded), bk, bv]
      wo_ref      : (HD, Cq_pad)    out-projection, (in, out) layout, zero-padded to 128 lanes
      bo_ref      : (1, Cq_pad)
      headmask_ref: (H*Lk, HD)      1.0 where (row // Lk) == (col // head_dim) else 0.0
      gsum_ref    : (H*Lk, H*Lk)    block-diagonal ones over per-head key groups
      out_ref     : (Bt, Lq, Cq_pad)
    """
    H = head_num
    Bt, Lq, Cq = q_ref.shape
    _, Lk, Ck = k_ref.shape
    f32 = jnp.float32

    wq = wqkv_ref[0, :Cq, :].astype(compute_dtype)      # (Cq, HD)
    wk = wqkv_ref[1, :Ck, :].astype(compute_dtype)      # (Ck, HD)
    wv = wqkv_ref[2, :Ck, :].astype(compute_dtype)      # (Ck, HD)
    wo = wo_ref[...].astype(compute_dtype)              # (HD, Cq_pad)
    bq = bqkv_ref[0:1, :]                               # (1, HD) f32
    bk = bqkv_ref[1:2, :]
    bv = bqkv_ref[2:3, :]
    bo = bo_ref[...]                                    # (1, Cq_pad) f32
    headmask = headmask_ref[...]                        # (H*Lk, HD) f32
    gsum = gsum_ref[...]                                # (H*Lk, H*Lk) f32

    for b in range(Bt):  # static unroll; Bt is 1 (v7x: 2 parallel steps) or B (single step)
        q2 = q_ref[b].astype(compute_dtype)             # (Lq, Cq)
        k2 = k_ref[b].astype(compute_dtype)             # (Lk, Ck)
        v2 = v_ref[b].astype(compute_dtype)             # (Lk, Ck)

        # --- QKV projections: three plain 2-D MXU matmuls (heads merged in lanes).
        qp = jnp.dot(q2, wq, preferred_element_type=f32) + bq    # (Lq, HD), scale folded in
        kp = jnp.dot(k2, wk, preferred_element_type=f32) + bk    # (Lk, HD)
        vp = jnp.dot(v2, wv, preferred_element_type=f32) + bv    # (Lk, HD)

        # --- Head separation with zero relayout: replicate K/V rows H times along
        # sublanes and zero the lanes that don't belong to that replica's head.
        kb = (jnp.concatenate([kp] * H, axis=0) * headmask).astype(compute_dtype)  # (H*Lk, HD)
        vb = (jnp.concatenate([vp] * H, axis=0) * headmask).astype(compute_dtype)  # (H*Lk, HD)

        # --- Per-head scores in one matmul: s[q, h*Lk + k] = <q_h, k_h> / temp.
        s = lax.dot_general(qp.astype(compute_dtype), kb,
                            (((1,), (1,)), ((), ())),
                            preferred_element_type=f32)          # (Lq, H*Lk)

        # --- Softmax over each head's Lk-key lane group.  The global row max is a
        # valid shift (it cancels exactly in the per-group normalization).
        m = jnp.max(s, axis=-1, keepdims=True)
        e = jnp.exp(s - m)                                       # (Lq, H*Lk) f32
        denom = jnp.dot(e, gsum, preferred_element_type=f32)     # per-head sums, already
                                                                 # broadcast across each group
        attn = e * pl.reciprocal(denom, approx=False)            # exact: f32 parity

        # --- Context comes out directly in concat-of-heads (Lq, HD) layout.
        ctx = jnp.dot(attn.astype(compute_dtype), vb,
                      preferred_element_type=f32)                # (Lq, HD)

        # --- Single output projection into the 128-lane-padded slab (unmasked store).
        out = jnp.dot(ctx.astype(compute_dtype), wo,
                      preferred_element_type=f32) + bo           # (Lq, Cq_pad)
        out_ref[b] = out.astype(out_ref.dtype)


def multi_head_attention(q, k, v, params, head_num, *,
                         compute_dtype=jnp.float32, grid_steps=None):
    """q: (B, Lq, Cq), k/v: (B, Lk, Ck). Returns (B, Lq, Cq) float32.

    compute_dtype: jnp.bfloat16 halves MXU-operand / weight bytes on v6e/v7x
      (softmax and accumulation stay f32); default f32 keeps reference parity.
    grid_steps: batch-tile steps. Default 2 when B splits evenly (one 'parallel'
      step per v7x TensorCore); pass 1 on single-TC chips (v5e/v6e) to remove
      the ~0.35 us per-step pipeline overhead entirely.
    """
    B, Lq, Cq = q.shape
    _, Lk, Ck = k.shape
    HD = params["wq"].shape[0]
    H = head_num
    D = HD // H
    inv_temp = 1.0 / math.sqrt(HD)      # module: temperature = sqrt(head_num * head_dim)

    LANE = 128
    Cq_pad = ((Cq + LANE - 1) // LANE) * LANE
    Cmax = max(Cq, Ck)

    # ---- Host-side packing (free plumbing): lane-dense 2-D (in, out) weights.
    def to_in_out(w, rows):             # nn.Linear weight (out, in) -> (in, out), row-padded
        wt = w.T
        return jnp.pad(wt, ((0, rows - wt.shape[0]), (0, 0)))

    wqkv = jnp.stack([to_in_out(params["wq"] * inv_temp, Cmax),
                      to_in_out(params["wk"], Cmax),
                      to_in_out(params["wv"], Cmax)])                       # (3, Cmax, HD)
    bqkv = jnp.stack([params["bq"] * inv_temp, params["bk"], params["bv"]]) # (3, HD)
    wo = jnp.pad(params["wo"].T, ((0, 0), (0, Cq_pad - Cq)))                # (HD, Cq_pad)
    bo = jnp.pad(params["bo"], (0, Cq_pad - Cq)).reshape(1, Cq_pad)         # (1, Cq_pad)

    # Static head-separation masks (host-side constants; replicated blocks => DMA'd once).
    j_ids = jnp.arange(H * Lk)
    headmask = (j_ids[:, None] // Lk ==
                jnp.arange(HD)[None, :] // D).astype(jnp.float32)           # (H*Lk, HD)
    gsum = (j_ids[:, None] // Lk == j_ids[None, :] // Lk).astype(jnp.float32)  # (H*Lk, H*Lk)

    if grid_steps is None:
        grid_steps = 2 if (B >= 2 and B % 2 == 0) else 1
    G = grid_steps
    assert B % G == 0, "batch must divide evenly over grid steps"
    Bt = B // G

    kernel = functools.partial(_mha_kernel, head_num=H, compute_dtype=compute_dtype)

    def rep(shape):                      # same block every step -> fetched once
        nd = len(shape)
        return pl.BlockSpec(shape, lambda i: (0,) * nd)

    grid_spec = pltpu.PrefetchScalarGridSpec(
        num_scalar_prefetch=0,
        grid=(G,),
        in_specs=[
            pl.BlockSpec((Bt, Lq, Cq), lambda i: (i, 0, 0)),   # q
            pl.BlockSpec((Bt, Lk, Ck), lambda i: (i, 0, 0)),   # k
            pl.BlockSpec((Bt, Lk, Ck), lambda i: (i, 0, 0)),   # v
            rep((3, Cmax, HD)),                                # Wq/Wk/Wv packed
            rep((3, HD)),                                      # bq/bk/bv packed
            rep((HD, Cq_pad)),                                 # Wo (lane-padded)
            rep((1, Cq_pad)),                                  # bo (lane-padded)
            rep((H * Lk, HD)),                                 # head mask
            rep((H * Lk, H * Lk)),                             # per-head group-sum matrix
        ],
        out_specs=pl.BlockSpec((Bt, Lq, Cq_pad), lambda i: (i, 0, 0)),
    )

    out_pad = pl.pallas_call(
        kernel,
        out_shape=jax.ShapeDtypeStruct((B, Lq, Cq_pad), jnp.float32),
        grid_spec=grid_spec,
        compiler_params=pltpu.CompilerParams(
            dimension_semantics=("parallel",)),   # batch tiles across TCs on v7x
    )(q, k, v, wqkv, bqkv, wo, bo, headmask, gsum)

    return out_pad[:, :, :Cq]   # drop lane padding (free wrapper plumbing; fuses under jit)


def _reference(q, k, v, params, head_num):
    """Pure-JAX reference mirroring the PyTorch forward (mask=None, eval mode)."""
    B, Lq, Cq = q.shape
    HD = params["wq"].shape[0]
    D = HD // head_num
    temp = math.sqrt(HD)
    qp = q @ params["wq"].T + params["bq"]
    kp = k @ params["wk"].T + params["bk"]
    vp = v @ params["wv"].T + params["bv"]
    qh = qp.reshape(B, Lq, head_num, D).transpose(0, 2, 1, 3)
    kh = kp.reshape(B, -1, head_num, D).transpose(0, 2, 1, 3)
    vh = vp.reshape(B, -1, head_num, D).transpose(0, 2, 1, 3)
    attn = jax.nn.softmax(jnp.einsum("bhqd,bhkd->bhqk", qh, kh) / temp, axis=-1)
    out = jnp.einsum("bhqk,bhkd->bhqd", attn, vh)
    out = out.transpose(0, 2, 1, 3).reshape(B, Lq, HD)
    return out @ params["wo"].T + params["bo"]


if __name__ == "__main__":
    # Small shapes consistent with the module:
    #   q_channels = k_channels = 32, head_num = 8 -> head_dim = 4
    B, Lq, Lk = 2, 8, 8
    q_channels, k_channels, head_num = 32, 32, 8
    HD = q_channels  # head_num * head_dim

    key = jax.random.PRNGKey(0)
    keys = jax.random.split(key, 11)
    q = jax.random.normal(keys[0], (B, Lq, q_channels), jnp.float32)
    k = jax.random.normal(keys[1], (B, Lk, k_channels), jnp.float32)
    v = jax.random.normal(keys[2], (B, Lk, k_channels), jnp.float32)

    # Deterministic parameter init (uniform, ~ nn.Linear scale).
    def lin(kk, out_f, in_f):
        bound = 1.0 / math.sqrt(in_f)
        return jax.random.uniform(kk, (out_f, in_f), jnp.float32, -bound, bound)

    params = {
        "wq": lin(keys[3], HD, q_channels),
        "bq": jax.random.uniform(keys[4], (HD,), jnp.float32, -0.1, 0.1),
        "wk": lin(keys[5], HD, k_channels),
        "bk": jax.random.uniform(keys[6], (HD,), jnp.float32, -0.1, 0.1),
        "wv": lin(keys[7], HD, k_channels),
        "bv": jax.random.uniform(keys[8], (HD,), jnp.float32, -0.1, 0.1),
        "wo": lin(keys[9], q_channels, HD),
        "bo": jax.random.uniform(keys[10], (q_channels,), jnp.float32, -0.1, 0.1),
    }

    out = multi_head_attention(q, k, v, params, head_num)
    out = jax.block_until_ready(out)

    ref = _reference(q, k, v, params, head_num)
    assert out.shape == (B, Lq, q_channels)
    assert jnp.allclose(out, ref, atol=1e-3, rtol=1e-3), \
        float(jnp.max(jnp.abs(out - ref)))

    print("KERNEL_OK")
</pallas_src>

<mosaic_0001>
module attributes {stable_mosaic.version = 11 : i64} {
  func.func @_mha_kernel(%arg0: i32, %arg1: memref<1x8x32xf32, #tpu.memory_space<vmem>>, %arg2: memref<1x8x32xf32, #tpu.memory_space<vmem>>, %arg3: memref<1x8x32xf32, #tpu.memory_space<vmem>>, %arg4: memref<3x32x32xf32, #tpu.memory_space<vmem>>, %arg5: memref<3x32xf32, #tpu.memory_space<vmem>>, %arg6: memref<32x128xf32, #tpu.memory_space<vmem>>, %arg7: memref<1x128xf32, #tpu.memory_space<vmem>>, %arg8: memref<64x32xf32, #tpu.memory_space<vmem>>, %arg9: memref<64x64xf32, #tpu.memory_space<vmem>>, %arg10: memref<1x8x128xf32, #tpu.memory_space<vmem>>) attributes {dimension_semantics = [#tpu.dimension_semantics<parallel>], iteration_bounds = array<i64: 2>, scalar_prefetch = 0 : i64, scratch_operands = 0 : i64, tpu.core_type = #tpu.core_type<tc>, window_params = [{transform_indices = @transform_0, window_bounds = array<i64: 1, 8, 32>}, {transform_indices = @transform_1, window_bounds = array<i64: 1, 8, 32>}, {transform_indices = @transform_2, window_bounds = array<i64: 1, 8, 32>}, {pipeline_mode = #tpu.pipeline_mode<synchronous>, transform_indices = @transform_3, window_bounds = array<i64: 3, 32, 32>}, {pipeline_mode = #tpu.pipeline_mode<synchronous>, transform_indices = @transform_4, window_bounds = array<i64: 3, 32>}, {pipeline_mode = #tpu.pipeline_mode<synchronous>, transform_indices = @transform_5, window_bounds = array<i64: 32, 128>}, {pipeline_mode = #tpu.pipeline_mode<synchronous>, transform_indices = @transform_6, window_bounds = array<i64: 1, 128>}, {pipeline_mode = #tpu.pipeline_mode<synchronous>, transform_indices = @transform_7, window_bounds = array<i64: 64, 32>}, {pipeline_mode = #tpu.pipeline_mode<synchronous>, transform_indices = @transform_8, window_bounds = array<i64: 64, 64>}, {transform_indices = @transform_9, window_bounds = array<i64: 1, 8, 128>}]} {
    %c0 = arith.constant 0 : index
    %c0_0 = arith.constant 0 : index
    %c0_1 = arith.constant 0 : index
    %0 = vector.load %arg4[%c0, %c0_0, %c0_1] : memref<3x32x32xf32, #tpu.memory_space<vmem>>, vector<1x32x32xf32>
    %1 = vector.shape_cast %0 : vector<1x32x32xf32> to vector<32x32xf32>
    %c1 = arith.constant 1 : index
    %c0_2 = arith.constant 0 : index
    %c0_3 = arith.constant 0 : index
    %2 = vector.load %arg4[%c1, %c0_2, %c0_3] : memref<3x32x32xf32, #tpu.memory_space<vmem>>, vector<1x32x32xf32>
    %3 = vector.shape_cast %2 : vector<1x32x32xf32> to vector<32x32xf32>
    %c2 = arith.constant 2 : index
    %c0_4 = arith.constant 0 : index
    %c0_5 = arith.constant 0 : index
    %4 = vector.load %arg4[%c2, %c0_4, %c0_5] : memref<3x32x32xf32, #tpu.memory_space<vmem>>, vector<1x32x32xf32>
    %5 = vector.shape_cast %4 : vector<1x32x32xf32> to vector<32x32xf32>
    %c0_6 = arith.constant 0 : index
    %c0_7 = arith.constant 0 : index
    %6 = vector.load %arg6[%c0_6, %c0_7] : memref<32x128xf32, #tpu.memory_space<vmem>>, vector<32x128xf32>
    %c0_8 = arith.constant 0 : index
    %c0_9 = arith.constant 0 : index
    %7 = vector.load %arg5[%c0_8, %c0_9] : memref<3x32xf32, #tpu.memory_space<vmem>>, vector<1x32xf32>
    %c1_10 = arith.constant 1 : index
    %c0_11 = arith.constant 0 : index
    %8 = vector.load %arg5[%c1_10, %c0_11] : memref<3x32xf32, #tpu.memory_space<vmem>>, vector<1x32xf32>
    %c2_12 = arith.constant 2 : index
    %c0_13 = arith.constant 0 : index
    %9 = vector.load %arg5[%c2_12, %c0_13] : memref<3x32xf32, #tpu.memory_space<vmem>>, vector<1x32xf32>
    %c0_14 = arith.constant 0 : index
    %c0_15 = arith.constant 0 : index
    %10 = vector.load %arg7[%c0_14, %c0_15] : memref<1x128xf32, #tpu.memory_space<vmem>>, vector<1x128xf32>
    %c0_16 = arith.constant 0 : index
    %c0_17 = arith.constant 0 : index
    %11 = vector.load %arg8[%c0_16, %c0_17] : memref<64x32xf32, #tpu.memory_space<vmem>>, vector<64x32xf32>
    %c0_18 = arith.constant 0 : index
    %c0_19 = arith.constant 0 : index
    %12 = vector.load %arg9[%c0_18, %c0_19] : memref<64x64xf32, #tpu.memory_space<vmem>>, vector<64x64xf32>
    %c0_20 = arith.constant 0 : index
    %c0_21 = arith.constant 0 : index
    %c0_22 = arith.constant 0 : index
    %13 = vector.load %arg1[%c0_20, %c0_21, %c0_22] : memref<1x8x32xf32, #tpu.memory_space<vmem>>, vector<1x8x32xf32>
    %14 = vector.shape_cast %13 : vector<1x8x32xf32> to vector<8x32xf32>
    %c0_23 = arith.constant 0 : index
    %c0_24 = arith.constant 0 : index
    %c0_25 = arith.constant 0 : index
    %15 = vector.load %arg2[%c0_23, %c0_24, %c0_25] : memref<1x8x32xf32, #tpu.memory_space<vmem>>, vector<1x8x32xf32>
    %16 = vector.shape_cast %15 : vector<1x8x32xf32> to vector<8x32xf32>
    %c0_26 = arith.constant 0 : index
    %c0_27 = arith.constant 0 : index
    %c0_28 = arith.constant 0 : index
    %17 = vector.load %arg3[%c0_26, %c0_27, %c0_28] : memref<1x8x32xf32, #tpu.memory_space<vmem>>, vector<1x8x32xf32>
    %18 = vector.shape_cast %17 : vector<1x8x32xf32> to vector<8x32xf32>
    %cst = arith.constant dense<0.000000e+00> : vector<8x32xf32>
    %19 = tpu.matmul %14, %1, %cst {dimension_numbers = #tpu.dot_dimension_numbers<[1], [0], [0], [1], [0, 0, 1, 1], [], []>} : vector<8x32xf32>, vector<32x32xf32>, vector<8x32xf32> -> vector<8x32xf32>
    %20 = vector.broadcast %7 : vector<1x32xf32> to vector<8x32xf32>
    %21 = arith.addf %19, %20 : vector<8x32xf32>
    %cst_29 = arith.constant dense<0.000000e+00> : vector<8x32xf32>
    %22 = tpu.matmul %16, %3, %cst_29 {dimension_numbers = #tpu.dot_dimension_numbers<[1], [0], [0], [1], [0, 0, 1, 1], [], []>} : vector<8x32xf32>, vector<32x32xf32>, vector<8x32xf32> -> vector<8x32xf32>
    %23 = vector.broadcast %8 : vector<1x32xf32> to vector<8x32xf32>
    %24 = arith.addf %22, %23 : vector<8x32xf32>
    %cst_30 = arith.constant dense<0.000000e+00> : vector<8x32xf32>
    %25 = tpu.matmul %18, %5, %cst_30 {dimension_numbers = #tpu.dot_dimension_numbers<[1], [0], [0], [1], [0, 0, 1, 1], [], []>} : vector<8x32xf32>, vector<32x32xf32>, vector<8x32xf32> -> vector<8x32xf32>
    %26 = vector.broadcast %9 : vector<1x32xf32> to vector<8x32xf32>
    %27 = arith.addf %25, %26 : vector<8x32xf32>
    %28 = tpu.concatenate %24, %24, %24, %24, %24, %24, %24, %24 in 0 : vector<8x32xf32>, vector<8x32xf32>, vector<8x32xf32>, vector<8x32xf32>, vector<8x32xf32>, vector<8x32xf32>, vector<8x32xf32>, vector<8x32xf32> -> vector<64x32xf32>
    %29 = arith.mulf %28, %11 : vector<64x32xf32>
    %30 = tpu.concatenate %27, %27, %27, %27, %27, %27, %27, %27 in 0 : vector<8x32xf32>, vector<8x32xf32>, vector<8x32xf32>, vector<8x32xf32>, vector<8x32xf32>, vector<8x32xf32>, vector<8x32xf32>, vector<8x32xf32> -> vector<64x32xf32>
    %31 = arith.mulf %30, %11 : vector<64x32xf32>
    %cst_31 = arith.constant dense<0.000000e+00> : vector<8x64xf32>
    %32 = tpu.matmul %21, %29, %cst_31 {dimension_numbers = #tpu.dot_dimension_numbers<[1], [1], [0], [0], [0, 0, 1, 0], [], []>} : vector<8x32xf32>, vector<64x32xf32>, vector<8x64xf32> -> vector<8x64xf32>
    %cst_32 = arith.constant dense<0xFF800000> : vector<8xf32>
    %33 = vector.multi_reduction <maximumf>, %32, %cst_32 [1] : vector<8x64xf32> to vector<8xf32>
    %34 = vector.shape_cast %33 : vector<8xf32> to vector<8x1xf32>
    %35 = vector.broadcast %34 : vector<8x1xf32> to vector<8x64xf32>
    %36 = arith.subf %32, %35 : vector<8x64xf32>
    %37 = math.exp %36 : vector<8x64xf32>
    %cst_33 = arith.constant dense<0.000000e+00> : vector<8x64xf32>
    %38 = tpu.matmul %37, %12, %cst_33 {dimension_numbers = #tpu.dot_dimension_numbers<[1], [0], [0], [1], [0, 0, 1, 1], [], []>} : vector<8x64xf32>, vector<64x64xf32>, vector<8x64xf32> -> vector<8x64xf32>
    %39 = tpu.reciprocal %38 : vector<8x64xf32> -> vector<8x64xf32>
    %40 = arith.mulf %37, %39 : vector<8x64xf32>
    %cst_34 = arith.constant dense<0.000000e+00> : vector<8x32xf32>
    %41 = tpu.matmul %40, %31, %cst_34 {dimension_numbers = #tpu.dot_dimension_numbers<[1], [0], [0], [1], [0, 0, 1, 1], [], []>} : vector<8x64xf32>, vector<64x32xf32>, vector<8x32xf32> -> vector<8x32xf32>
    %cst_35 = arith.constant dense<0.000000e+00> : vector<8x128xf32>
    %42 = tpu.matmul %41, %6, %cst_35 {dimension_numbers = #tpu.dot_dimension_numbers<[1], [0], [0], [1], [0, 0, 1, 1], [], []>} : vector<8x32xf32>, vector<32x128xf32>, vector<8x128xf32> -> vector<8x128xf32>
    %43 = vector.broadcast %10 : vector<1x128xf32> to vector<8x128xf32>
    %44 = arith.addf %42, %43 : vector<8x128xf32>
    %c0_36 = arith.constant 0 : index
    %c0_37 = arith.constant 0 : index
    %c0_38 = arith.constant 0 : index
    %45 = vector.load %arg10[%c0_36, %c0_37, %c0_38] : memref<1x8x128xf32, #tpu.memory_space<vmem>>, vector<1x8x128xf32>
    %46 = vector.shape_cast %45 : vector<1x8x128xf32> to vector<8x128xf32>
    %47 = vector.shape_cast %44 : vector<8x128xf32> to vector<1x8x128xf32>
    tpu.vector_store %arg10[%c0_36, %c0_37, %c0_38], %47 {strides = array<i32>} : memref<1x8x128xf32, #tpu.memory_space<vmem>>, vector<1x8x128xf32>,
    return
  }
  func.func @transform_0(%arg0: i32) -> (i32, i32, i32) {
    %c0_i32 = arith.constant 0 : i32
    %c0_i32_0 = arith.constant 0 : i32
    %c0_i32_1 = arith.constant 0 : i32
    return %arg0, %c0_i32, %c0_i32_0 : i32, i32, i32
  }
  func.func @transform_1(%arg0: i32) -> (i32, i32, i32) {
    %c0_i32 = arith.constant 0 : i32
    %c0_i32_0 = arith.constant 0 : i32
    %c0_i32_1 = arith.constant 0 : i32
    return %arg0, %c0_i32, %c0_i32_0 : i32, i32, i32
  }
  func.func @transform_2(%arg0: i32) -> (i32, i32, i32) {
    %c0_i32 = arith.constant 0 : i32
    %c0_i32_0 = arith.constant 0 : i32
    %c0_i32_1 = arith.constant 0 : i32
    return %arg0, %c0_i32, %c0_i32_0 : i32, i32, i32
  }
  func.func @transform_3(%arg0: i32) -> (i32, i32, i32) {
    %c0_i32 = arith.constant 0 : i32
    %c0_i32_0 = arith.constant 0 : i32
    %c0_i32_1 = arith.constant 0 : i32
    %c0_i32_2 = arith.constant 0 : i32
    return %c0_i32, %c0_i32_0, %c0_i32_1 : i32, i32, i32
  }
  func.func @transform_4(%arg0: i32) -> (i32, i32) {
    %c0_i32 = arith.constant 0 : i32
    %c0_i32_0 = arith.constant 0 : i32
    %c0_i32_1 = arith.constant 0 : i32
    return %c0_i32, %c0_i32_0 : i32, i32
  }
  func.func @transform_5(%arg0: i32) -> (i32, i32) {
    %c0_i32 = arith.constant 0 : i32
    %c0_i32_0 = arith.constant 0 : i32
    %c0_i32_1 = arith.constant 0 : i32
    return %c0_i32, %c0_i32_0 : i32, i32
  }
  func.func @transform_6(%arg0: i32) -> (i32, i32) {
    %c0_i32 = arith.constant 0 : i32
    %c0_i32_0 = arith.constant 0 : i32
    %c0_i32_1 = arith.constant 0 : i32
    return %c0_i32, %c0_i32_0 : i32, i32
  }
  func.func @transform_7(%arg0: i32) -> (i32, i32) {
    %c0_i32 = arith.constant 0 : i32
    %c0_i32_0 = arith.constant 0 : i32
    %c0_i32_1 = arith.constant 0 : i32
    return %c0_i32, %c0_i32_0 : i32, i32
  }
  func.func @transform_8(%arg0: i32) -> (i32, i32) {
    %c0_i32 = arith.constant 0 : i32
    %c0_i32_0 = arith.constant 0 : i32
    %c0_i32_1 = arith.constant 0 : i32
    return %c0_i32, %c0_i32_0 : i32, i32
  }
  func.func @transform_9(%arg0: i32) -> (i32, i32, i32) {
    %c0_i32 = arith.constant 0 : i32
    %c0_i32_0 = arith.constant 0 : i32
    %c0_i32_1 = arith.constant 0 : i32
    return %arg0, %c0_i32, %c0_i32_0 : i32, i32, i32
  }
}

</mosaic_0001>

<llo_original>
// kernel: tpu_custom_call.1
$region0: #{tpu_custom_call.1}
  #allocation0 [shape = 'u32[]', space=smem, size = 0x4, offset = 0x4, fixed_abs, tag = 'smem constant byte address 0x4 - core index']
  #allocation1 [shape = 'u32[72,128]{1,0:T(1,128)}', space=vmem, size = 0x9000, scoped, tag = 'internal scratch']
  %s0 = inlined_call_operand.hbm [shape: f32[2,8,32], index: 0, kind: input, shape index: {}]
  %s1 = inlined_call_operand.hbm [shape: f32[2,8,32], index: 1, kind: input, shape index: {}]
  %s2 = inlined_call_operand.hbm [shape: f32[2,8,32], index: 2, kind: input, shape index: {}]
  %s3 = inlined_call_operand.vmem [shape: f32[3,32,32], index: 3, kind: input, shape index: {}]
  %s4 = inlined_call_operand.hbm [shape: f32[3,32], index: 4, kind: input, shape index: {}]
  %s5 = inlined_call_operand.hbm [shape: f32[32,128], index: 5, kind: input, shape index: {}]
  %s6 = inlined_call_operand.vmem [shape: f32[1,128], index: 6, kind: input, shape index: {}]
  %s7 = inlined_call_operand.vmem [shape: f32[64,32], index: 7, kind: input, shape index: {}]
  %s8 = inlined_call_operand.hbm [shape: f32[64,64], index: 8, kind: input, shape index: {}]
  %s9 = inlined_call_operand.hbm [shape: f32[2,8,128], index: 9, kind: output, shape index: {}]
  %s10 = sld [smem:[#allocation0]]
  $region93: #{tpu_custom_call.1} parent=0
    _
  %s12 = ssub.s32 1, %s10
  %s13 = scalar_select 0, %s12, %s10
  $region1: #{tpu_custom_call.1} parent=0
    #allocation2 [shape = 'u8[8192]{0}', space=vmem, size = 0x2000, scoped, tag = 'input window, operand 0']
    #allocation3 [shape = 's32[2]{0}', space=sflag, size = 0x8, scoped, tag = 'scoped memory for tpu_custom_call.1']
    #allocation4 [shape = 's32[2]{0}', space=sflag, size = 0x8, scoped, tag = 'scoped memory for tpu_custom_call.1']
    #allocation5 [shape = 'u8[8192]{0}', space=vmem, size = 0x2000, scoped, tag = 'input window, operand 1']
    #allocation6 [shape = 's32[2]{0}', space=sflag, size = 0x8, scoped, tag = 'scoped memory for tpu_custom_call.1']
    #allocation7 [shape = 'u8[8192]{0}', space=vmem, size = 0x2000, scoped, tag = 'input window, operand 2']
    #allocation8 [shape = 'u8[2048]{0}', space=vmem, size = 0x800, scoped, tag = 'input window, operand 4, single buffered']
    #allocation9 [shape = 's32[1]{0}', space=sflag, size = 0x4, scoped, tag = 'scoped memory for tpu_custom_call.1']
    #allocation10 [shape = 'u8[16384]{0}', space=vmem, size = 0x4000, scoped, tag = 'input window, operand 5, single buffered']
    #allocation11 [shape = 'u8[32768]{0}', space=vmem, size = 0x8000, scoped, tag = 'input window, operand 8, single buffered']
    #allocation12 [shape = 's32[1]{0}', space=sflag, size = 0x4, scoped, tag = 'scoped memory for tpu_custom_call.1']
    #allocation13 [shape = 'u8[8192]{0}', space=vmem, size = 0x2000, scoped, tag = 'output window, operand 0']
    %14 = vsyncpa [#allocation3], 0
    %s15 = scalar_lea.sflag [#allocation3], 1
    %16 = vsyncpa %s15, 0
    %17 = vsyncpa [#allocation6], 0
    %s18 = scalar_lea.sflag [#allocation6], 1
    %19 = vsyncpa %s18, 0
    %20 = vsyncpa [#allocation9], 0
    %21 = vsyncpa [#allocation12], 0
    %22 = vsyncpa [#allocation4], 0
    %s23 = scalar_lea.sflag [#allocation4], 1
    %24 = vsyncpa %s23, 0
    loop: start=0, step=1, limit=4
    $region2: #{tpu_custom_call.1} parent=1 // loop_pre_header
      _
    $region3: #{tpu_custom_call.1} parent=1 // loop_header
      %s26 = sphi 0, %s30
      %p27 = scmp.ge.s32.totalorder %s26, 4
      %s36 = sphi 0, %s38
      %s39 = sphi 0, %s36
      %s40 = sphi 0, %s39
      %s56 = sphi 0, %s40
      %s62 = sphi 0, %s64
      %s65 = sphi 0, %s62
      %s66 = sphi 0, %s65
      %s82 = sphi 0, %s66
      %s88 = sphi 0, %s90
      %s91 = sphi 0, %s88
      %s92 = sphi 0, %s91
      %s108 = sphi 0, %s92
      %s112 = sphi 0, %s112
      %s114 = sphi 0, %s112
      %s115 = sphi 0, %s114
      %s129 = sphi 0, %s115
      %s133 = sphi 0, %s133
      %s135 = sphi 0, %s133
      %s136 = sphi 0, %s135
      %s150 = sphi 0, %s136
      %s154 = sphi 0, %s154
      %s156 = sphi 0, %s154
      %s157 = sphi 0, %s156
      %s171 = sphi 0, %s157
      %s175 = sphi 0, %s175
      %s177 = sphi 0, %s175
      %s178 = sphi 0, %s177
      %s192 = sphi 0, %s178
      %s196 = sphi 0, %s196
      %s198 = sphi 0, %s196
      %s199 = sphi 0, %s198
      %s213 = sphi 0, %s199
      %s217 = sphi 0, %s217
      %s219 = sphi 0, %s217
      %s220 = sphi 0, %s219
      %s234 = sphi 0, %s220
      %s240 = sphi 0, %s242
      %s243 = sphi 0, %s240
      %s244 = sphi 0, %s243
      %s260 = sphi 0, %s244
    $region4: #{tpu_custom_call.1} parent=1 // loop_header_branch
      %29 = sbr.rel (%p27) target = $region8
    $region5: #{tpu_custom_call.1} parent=1 // loop_body
      %s31 = ssub.s32 %s26, 1
      %s32 = ssub.s32 %s26, 2
      %s33 = sadd.s32 %s26, 1
      %s34 = ssub.s32 %s26, %s33
      %p35 = scmp.eq.s32.totalorder %s34, 0
      %s37 = sadd.s32 %s36, 1
      %s38 = scalar_select %p35, %s36, %s37
      %p41 = pneg %p35
      %p42 = scmp.eq.s32.totalorder %s26, 1
      %p43 = por %p41, %p42
      %p44 = scmp.ne.s32.totalorder %s36, %s39
      %p45 = scmp.eq.s32.totalorder %s26, 0
      %p46 = por %p44, %p45
      %p47 = scmp.ne.s32.totalorder %s36, %s39
      %p48 = scmp.eq.s32.totalorder %s31, 1
      %p49 = por %p47, %p48
      %p50 = scmp.ne.s32.totalorder %s39, %s40
      %p51 = scmp.eq.s32.totalorder %s31, 0
      %p52 = por %p50, %p51
      %p53 = scmp.ne.s32.totalorder %s39, %s40
      %p54 = scmp.eq.s32.totalorder %s32, 1
      %p55 = por %p53, %p54
      %p57 = scmp.ne.s32.totalorder %s40, %s56
      %p58 = scmp.eq.s32.totalorder %s32, 0
      %p59 = por %p57, %p58
      %s60 = ssub.s32 %s26, %s33
      %p61 = scmp.eq.s32.totalorder %s60, 0
      %s63 = sadd.s32 %s62, 1
      %s64 = scalar_select %p61, %s62, %s63
      %p67 = pneg %p61
      %p68 = scmp.eq.s32.totalorder %s26, 1
      %p69 = por %p67, %p68
      %p70 = scmp.ne.s32.totalorder %s62, %s65
      %p71 = scmp.eq.s32.totalorder %s26, 0
      %p72 = por %p70, %p71
      %p73 = scmp.ne.s32.totalorder %s62, %s65
      %p74 = scmp.eq.s32.totalorder %s31, 1
      %p75 = por %p73, %p74
      %p76 = scmp.ne.s32.totalorder %s65, %s66
      %p77 = scmp.eq.s32.totalorder %s31, 0
      %p78 = por %p76, %p77
      %p79 = scmp.ne.s32.totalorder %s65, %s66
      %p80 = scmp.eq.s32.totalorder %s32, 1
      %p81 = por %p79, %p80
      %p83 = scmp.ne.s32.totalorder %s66, %s82
      %p84 = scmp.eq.s32.totalorder %s32, 0
      %p85 = por %p83, %p84
      %s86 = ssub.s32 %s26, %s33
      %p87 = scmp.eq.s32.totalorder %s86, 0
      %s89 = sadd.s32 %s88, 1
      %s90 = scalar_select %p87, %s88, %s89
      %p93 = pneg %p87
      %p94 = scmp.eq.s32.totalorder %s26, 1
      %p95 = por %p93, %p94
      %p96 = scmp.ne.s32.totalorder %s88, %s91
      %p97 = scmp.eq.s32.totalorder %s26, 0
      %p98 = por %p96, %p97
      %p99 = scmp.ne.s32.totalorder %s88, %s91
      %p100 = scmp.eq.s32.totalorder %s31, 1
      %p101 = por %p99, %p100
      %p102 = scmp.ne.s32.totalorder %s91, %s92
      %p103 = scmp.eq.s32.totalorder %s31, 0
      %p104 = por %p102, %p103
      %p105 = scmp.ne.s32.totalorder %s91, %s92
      %p106 = scmp.eq.s32.totalorder %s32, 1
      %p107 = por %p105, %p106
      %p109 = scmp.ne.s32.totalorder %s92, %s108
      %p110 = scmp.eq.s32.totalorder %s32, 0
      %p111 = por %p109, %p110
      %s113 = sadd.s32 %s112, 1
      %p116 = scmp.eq.s32.totalorder %s26, 1
      %p117 = scmp.ne.s32.totalorder %s112, %s114
      %p118 = scmp.eq.s32.totalorder %s26, 0
      %p119 = por %p117, %p118
      %p120 = scmp.ne.s32.totalorder %s112, %s114
      %p121 = scmp.eq.s32.totalorder %s31, 1
      %p122 = por %p120, %p121
      %p123 = scmp.ne.s32.totalorder %s114, %s115
      %p124 = scmp.eq.s32.totalorder %s31, 0
      %p125 = por %p123, %p124
      %p126 = scmp.ne.s32.totalorder %s114, %s115
      %p127 = scmp.eq.s32.totalorder %s32, 1
      %p128 = por %p126, %p127
      %p130 = scmp.ne.s32.totalorder %s115, %s129
      %p131 = scmp.eq.s32.totalorder %s32, 0
      %p132 = por %p130, %p131
      %s134 = sadd.s32 %s133, 1
      %p137 = scmp.eq.s32.totalorder %s26, 1
      %p138 = scmp.ne.s32.totalorder %s133, %s135
      %p139 = scmp.eq.s32.totalorder %s26, 0
      %p140 = por %p138, %p139
      %p141 = scmp.ne.s32.totalorder %s133, %s135
      %p142 = scmp.eq.s32.totalorder %s31, 1
      %p143 = por %p141, %p142
      %p144 = scmp.ne.s32.totalorder %s135, %s136
      %p145 = scmp.eq.s32.totalorder %s31, 0
      %p146 = por %p144, %p145
      %p147 = scmp.ne.s32.totalorder %s135, %s136
      %p148 = scmp.eq.s32.totalorder %s32, 1
      %p149 = por %p147, %p148
      %p151 = scmp.ne.s32.totalorder %s136, %s150
      %p152 = scmp.eq.s32.totalorder %s32, 0
      %p153 = por %p151, %p152
      %s155 = sadd.s32 %s154, 1
      %p158 = scmp.eq.s32.totalorder %s26, 1
      %p159 = scmp.ne.s32.totalorder %s154, %s156
      %p160 = scmp.eq.s32.totalorder %s26, 0
      %p161 = por %p159, %p160
      %p162 = scmp.ne.s32.totalorder %s154, %s156
      %p163 = scmp.eq.s32.totalorder %s31, 1
      %p164 = por %p162, %p163
      %p165 = scmp.ne.s32.totalorder %s156, %s157
      %p166 = scmp.eq.s32.totalorder %s31, 0
      %p167 = por %p165, %p166
      %p168 = scmp.ne.s32.totalorder %s156, %s157
      %p169 = scmp.eq.s32.totalorder %s32, 1
      %p170 = por %p168, %p169
      %p172 = scmp.ne.s32.totalorder %s157, %s171
      %p173 = scmp.eq.s32.totalorder %s32, 0
      %p174 = por %p172, %p173
      %s176 = sadd.s32 %s175, 1
      %p179 = scmp.eq.s32.totalorder %s26, 1
      %p180 = scmp.ne.s32.totalorder %s175, %s177
      %p181 = scmp.eq.s32.totalorder %s26, 0
      %p182 = por %p180, %p181
      %p183 = scmp.ne.s32.totalorder %s175, %s177
      %p184 = scmp.eq.s32.totalorder %s31, 1
      %p185 = por %p183, %p184
      %p186 = scmp.ne.s32.totalorder %s177, %s178
      %p187 = scmp.eq.s32.totalorder %s31, 0
      %p188 = por %p186, %p187
      %p189 = scmp.ne.s32.totalorder %s177, %s178
      %p190 = scmp.eq.s32.totalorder %s32, 1
      %p191 = por %p189, %p190
      %p193 = scmp.ne.s32.totalorder %s178, %s192
      %p194 = scmp.eq.s32.totalorder %s32, 0
      %p195 = por %p193, %p194
      %s197 = sadd.s32 %s196, 1
      %p200 = scmp.eq.s32.totalorder %s26, 1
      %p201 = scmp.ne.s32.totalorder %s196, %s198
      %p202 = scmp.eq.s32.totalorder %s26, 0
      %p203 = por %p201, %p202
      %p204 = scmp.ne.s32.totalorder %s196, %s198
      %p205 = scmp.eq.s32.totalorder %s31, 1
      %p206 = por %p204, %p205
      %p207 = scmp.ne.s32.totalorder %s198, %s199
      %p208 = scmp.eq.s32.totalorder %s31, 0
      %p209 = por %p207, %p208
      %p210 = scmp.ne.s32.totalorder %s198, %s199
      %p211 = scmp.eq.s32.totalorder %s32, 1
      %p212 = por %p210, %p211
      %p214 = scmp.ne.s32.totalorder %s199, %s213
      %p215 = scmp.eq.s32.totalorder %s32, 0
      %p216 = por %p214, %p215
      %s218 = sadd.s32 %s217, 1
      %p221 = scmp.eq.s32.totalorder %s26, 1
      %p222 = scmp.ne.s32.totalorder %s217, %s219
      %p223 = scmp.eq.s32.totalorder %s26, 0
      %p224 = por %p222, %p223
      %p225 = scmp.ne.s32.totalorder %s217, %s219
      %p226 = scmp.eq.s32.totalorder %s31, 1
      %p227 = por %p225, %p226
      %p228 = scmp.ne.s32.totalorder %s219, %s220
      %p229 = scmp.eq.s32.totalorder %s31, 0
      %p230 = por %p228, %p229
      %p231 = scmp.ne.s32.totalorder %s219, %s220
      %p232 = scmp.eq.s32.totalorder %s32, 1
      %p233 = por %p231, %p232
      %p235 = scmp.ne.s32.totalorder %s220, %s234
      %p236 = scmp.eq.s32.totalorder %s32, 0
      %p237 = por %p235, %p236
      %s238 = ssub.s32 %s26, %s33
      %p239 = scmp.eq.s32.totalorder %s238, 0
      %s241 = sadd.s32 %s240, 1
      %s242 = scalar_select %p239, %s240, %s241
      %p245 = pneg %p239
      %p246 = scmp.eq.s32.totalorder %s26, 1
      %p247 = por %p245, %p246
      %p248 = scmp.ne.s32.totalorder %s240, %s243
      %p249 = scmp.eq.s32.totalorder %s26, 0
      %p250 = por %p248, %p249
      %p251 = scmp.ne.s32.totalorder %s240, %s243
      %p252 = scmp.eq.s32.totalorder %s31, 1
      %p253 = por %p251, %p252
      %p254 = scmp.ne.s32.totalorder %s243, %s244
      %p255 = scmp.eq.s32.totalorder %s31, 0
      %p256 = por %p254, %p255
      %p257 = scmp.ne.s32.totalorder %s243, %s244
      %p258 = scmp.eq.s32.totalorder %s32, 1
      %p259 = por %p257, %p258
      %p261 = scmp.ne.s32.totalorder %s244, %s260
      %p262 = scmp.eq.s32.totalorder %s32, 0
      %p263 = por %p261, %p262
      %p264 = scmp.le.s32.totalorder 1, %s26
      %p265 = scmp.lt.s32.totalorder %s26, 3
      %p266 = pnand %p264, %p265
      %p267 = pneg %p266
      // Predicated region
      $region9: #{tpu_custom_call.1} parent=5 // pred_check
        _
      $region10: #{tpu_custom_call.1} parent=5 // pred_check_branch
        %269 = sbr.rel (%p266) target = $region12
      $region11: #{tpu_custom_call.1} parent=5 // pred_region
        %s270 = ssub.s32 %s26, 1
        // Predicated region
        $region13: #{tpu_custom_call.1} parent=11 // pred_check
          %p271 = pneg %p125
        $region14: #{tpu_custom_call.1} parent=11 // pred_check_branch
          %273 = sbr.rel (%p271) target = $region16
        $region15: #{tpu_custom_call.1} parent=11 // pred_region
          _
        $region16: #{tpu_custom_call.1} parent=11 // pred_fallthru
          _
        // Predicated region
        $region17: #{tpu_custom_call.1} parent=11 // pred_check
          %p274 = pneg %p146
        $region18: #{tpu_custom_call.1} parent=11 // pred_check_branch
          %276 = sbr.rel (%p274) target = $region20
        $region19: #{tpu_custom_call.1} parent=11 // pred_region
          %278 = vsyncadd [#allocation9], 0
          %s280 = sshll.u32 %s4, 4
          %s281 = int_to_ptr.hbm [resolvable:$true] %s280
          %s282 = sshll.u32 [#allocation8], 4
          %s283 = int_to_ptr.vmem [resolvable:$true] %s282
          %285 = dma.hbm_to_vmem [thread:$0]  %s281, 64, %s283, [#allocation9]
        $region20: #{tpu_custom_call.1} parent=11 // pred_fallthru
          _
        // Predicated region
        $region21: #{tpu_custom_call.1} parent=11 // pred_check
          %p286 = pneg %p167
        $region22: #{tpu_custom_call.1} parent=11 // pred_check_branch
          %288 = sbr.rel (%p286) target = $region24
        $region23: #{tpu_custom_call.1} parent=11 // pred_region
          %290 = vsyncadd [#allocation9], 0
          %s291 = sshll.u32 %s5, 4
          %s292 = int_to_ptr.hbm [resolvable:$true] %s291
          %s293 = sshll.u32 [#allocation10], 4
          %s294 = int_to_ptr.vmem [resolvable:$true] %s293
          %299 = dma.hbm_to_vmem [thread:$0]  %s292, 512, %s294, [#allocation9], 128, 128, 8
        $region24: #{tpu_custom_call.1} parent=11 // pred_fallthru
          _
        // Predicated region
        $region25: #{tpu_custom_call.1} parent=11 // pred_check
          %p300 = pneg %p188
        $region26: #{tpu_custom_call.1} parent=11 // pred_check_branch
          %302 = sbr.rel (%p300) target = $region28
        $region27: #{tpu_custom_call.1} parent=11 // pred_region
          _
        $region28: #{tpu_custom_call.1} parent=11 // pred_fallthru
          _
        // Predicated region
        $region29: #{tpu_custom_call.1} parent=11 // pred_check
          %p303 = pneg %p209
        $region30: #{tpu_custom_call.1} parent=11 // pred_check_branch
          %305 = sbr.rel (%p303) target = $region32
        $region31: #{tpu_custom_call.1} parent=11 // pred_region
          _
        $region32: #{tpu_custom_call.1} parent=11 // pred_fallthru
          _
        // Predicated region
        $region33: #{tpu_custom_call.1} parent=11 // pred_check
          %p306 = pneg %p230
        $region34: #{tpu_custom_call.1} parent=11 // pred_check_branch
          %308 = sbr.rel (%p306) target = $region36
        $region35: #{tpu_custom_call.1} parent=11 // pred_region
          %310 = vsyncadd [#allocation12], 0
          %s311 = sshll.u32 %s8, 4
          %s312 = int_to_ptr.hbm [resolvable:$true] %s311
          %s313 = sshll.u32 [#allocation11], 4
          %s314 = int_to_ptr.vmem [resolvable:$true] %s313
          %319 = dma.hbm_to_vmem [thread:$0]  %s312, 1024, %s314, [#allocation12], 128, 128, 8
        $region36: #{tpu_custom_call.1} parent=11 // pred_fallthru
          _
      $region12: #{tpu_custom_call.1} parent=5 // pred_fallthru
        _
      %p320 = scmp.lt.s32.totalorder %s26, 2
      // Predicated region
      $region37: #{tpu_custom_call.1} parent=5 // pred_check
        %p321 = pneg %p320
      $region38: #{tpu_custom_call.1} parent=5 // pred_check_branch
        %323 = sbr.rel (%p321) target = $region40
      $region39: #{tpu_custom_call.1} parent=5 // pred_region
        // Predicated region
        $region41: #{tpu_custom_call.1} parent=39 // pred_check
          %p324 = pneg %p46
        $region42: #{tpu_custom_call.1} parent=39 // pred_check_branch
          %326 = sbr.rel (%p324) target = $region44
        $region43: #{tpu_custom_call.1} parent=39 // pred_region
          %s327 = sand.u32 %s36, 1
          %s328 = scalar_lea.sflag [#allocation3], %s327
          %s329 = sand.u32 %s36, 1
          %s330 = smul.addr %s329, 8
          %s331 = scalar_lea.vmem [#allocation2], %s330
          %333 = vsyncadd %s328, 0
          %s334 = smul.addr %s26, 8
          %s335 = scalar_lea.hbm %s0, %s334
          %s337 = sshll.u32 %s335, 4
          %s338 = int_to_ptr.hbm [resolvable:$true] %s337
          %s339 = sshll.u32 %s331, 4
          %s340 = int_to_ptr.vmem [resolvable:$true] %s339
          %342 = dma.hbm_to_vmem [thread:$0]  %s338, 128, %s340, %s328
        $region44: #{tpu_custom_call.1} parent=39 // pred_fallthru
          _
        // Predicated region
        $region45: #{tpu_custom_call.1} parent=39 // pred_check
          %p343 = pneg %p72
        $region46: #{tpu_custom_call.1} parent=39 // pred_check_branch
          %345 = sbr.rel (%p343) target = $region48
        $region47: #{tpu_custom_call.1} parent=39 // pred_region
          %s346 = sand.u32 %s26, 1
          %s347 = scalar_lea.sflag [#allocation6], %s346
          %s348 = sand.u32 %s62, 1
          %s349 = smul.addr %s348, 8
          %s350 = scalar_lea.vmem [#allocation5], %s349
          %352 = vsyncadd %s347, 0
          %s353 = smul.addr %s26, 8
          %s354 = scalar_lea.hbm %s1, %s353
          %s356 = sshll.u32 %s354, 4
          %s357 = int_to_ptr.hbm [resolvable:$true] %s356
          %s358 = sshll.u32 %s350, 4
          %s359 = int_to_ptr.vmem [resolvable:$true] %s358
          %361 = dma.hbm_to_vmem [thread:$0]  %s357, 128, %s359, %s347
        $region48: #{tpu_custom_call.1} parent=39 // pred_fallthru
          _
        // Predicated region
        $region49: #{tpu_custom_call.1} parent=39 // pred_check
          %p362 = pneg %p98
        $region50: #{tpu_custom_call.1} parent=39 // pred_check_branch
          %364 = sbr.rel (%p362) target = $region52
        $region51: #{tpu_custom_call.1} parent=39 // pred_region
          %s365 = sand.u32 %s26, 1
          %s366 = scalar_lea.sflag [#allocation6], %s365
          %s367 = sand.u32 %s88, 1
          %s368 = smul.addr %s367, 8
          %s369 = scalar_lea.vmem [#allocation7], %s368
          %371 = vsyncadd %s366, 0
          %s372 = smul.addr %s26, 8
          %s373 = scalar_lea.hbm %s2, %s372
          %s375 = sshll.u32 %s373, 4
          %s376 = int_to_ptr.hbm [resolvable:$true] %s375
          %s377 = sshll.u32 %s369, 4
          %s378 = int_to_ptr.vmem [resolvable:$true] %s377
          %380 = dma.hbm_to_vmem [thread:$0]  %s376, 128, %s378, %s366
        $region52: #{tpu_custom_call.1} parent=39 // pred_fallthru
          _
      $region40: #{tpu_custom_call.1} parent=5 // pred_fallthru
        _
      %p381 = scmp.le.s32.totalorder 1, %s26
      %p382 = scmp.lt.s32.totalorder %s26, 3
      %p383 = pnand %p381, %p382
      %p384 = pneg %p383
      // Predicated region
      $region53: #{tpu_custom_call.1} parent=5 // pred_check
        _
      $region54: #{tpu_custom_call.1} parent=5 // pred_check_branch
        %386 = sbr.rel (%p383) target = $region56
      $region55: #{tpu_custom_call.1} parent=5 // pred_region
        %s387 = ssub.s32 %s26, 1
        %s388 = sand.u32 %s39, 1
        %s389 = scalar_lea.sflag [#allocation3], %s388
        %s390 = sand.u32 %s39, 1
        %s391 = smul.addr %s390, 8
        %s392 = scalar_lea.vmem [#allocation2], %s391
        // Predicated region
        $region57: #{tpu_custom_call.1} parent=55 // pred_check
          %p393 = pneg %p52
        $region58: #{tpu_custom_call.1} parent=55 // pred_check_branch
          %395 = sbr.rel (%p393) target = $region60
        $region59: #{tpu_custom_call.1} parent=55 // pred_region
          %397 = dma.done %s389, 128
        $region60: #{tpu_custom_call.1} parent=55 // pred_fallthru
          _
        %s398 = sand.u32 %s31, 1
        %s399 = scalar_lea.sflag [#allocation6], %s398
        %s400 = sand.u32 %s65, 1
        %s401 = smul.addr %s400, 8
        %s402 = scalar_lea.vmem [#allocation5], %s401
        // Predicated region
        $region61: #{tpu_custom_call.1} parent=55 // pred_check
          %p403 = pneg %p78
        $region62: #{tpu_custom_call.1} parent=55 // pred_check_branch
          %405 = sbr.rel (%p403) target = $region64
        $region63: #{tpu_custom_call.1} parent=55 // pred_region
          %407 = dma.done %s399, 128
        $region64: #{tpu_custom_call.1} parent=55 // pred_fallthru
          _
        %s408 = sand.u32 %s31, 1
        %s409 = scalar_lea.sflag [#allocation6], %s408
        %s410 = sand.u32 %s91, 1
        %s411 = smul.addr %s410, 8
        %s412 = scalar_lea.vmem [#allocation7], %s411
        // Predicated region
        $region65: #{tpu_custom_call.1} parent=55 // pred_check
          %p413 = pneg %p104
        $region66: #{tpu_custom_call.1} parent=55 // pred_check_branch
          %415 = sbr.rel (%p413) target = $region68
        $region67: #{tpu_custom_call.1} parent=55 // pred_region
          %417 = dma.done %s409, 128
        $region68: #{tpu_custom_call.1} parent=55 // pred_fallthru
          _
        // Predicated region
        $region69: #{tpu_custom_call.1} parent=55 // pred_check
          %p418 = pneg %p146
        $region70: #{tpu_custom_call.1} parent=55 // pred_check_branch
          %420 = sbr.rel (%p418) target = $region72
        $region71: #{tpu_custom_call.1} parent=55 // pred_region
          %422 = dma.done [#allocation9], 64
        $region72: #{tpu_custom_call.1} parent=55 // pred_fallthru
          _
        // Predicated region
        $region73: #{tpu_custom_call.1} parent=55 // pred_check
          %p423 = pneg %p167
        $region74: #{tpu_custom_call.1} parent=55 // pred_check_branch
          %425 = sbr.rel (%p423) target = $region76
        $region75: #{tpu_custom_call.1} parent=55 // pred_region
          %427 = dma.done [#allocation9], 512
        $region76: #{tpu_custom_call.1} parent=55 // pred_fallthru
          _
        // Predicated region
        $region77: #{tpu_custom_call.1} parent=55 // pred_check
          %p428 = pneg %p230
        $region78: #{tpu_custom_call.1} parent=55 // pred_check_branch
          %430 = sbr.rel (%p428) target = $region80
        $region79: #{tpu_custom_call.1} parent=55 // pred_region
          %432 = dma.done [#allocation12], 1024
        $region80: #{tpu_custom_call.1} parent=55 // pred_fallthru
          _
        %s433 = sand.u32 %s39, 1
        %s434 = scalar_lea.sflag [#allocation3], %s433
        %s435 = sand.u32 %s39, 1
        %s436 = smul.addr %s435, 8
        %s437 = scalar_lea.vmem [#allocation2], %s436
        %p438 = pneg %p52
        %p439 = pneg %p49
        %s440 = sand.u32 %s31, 1
        %s441 = scalar_lea.sflag [#allocation6], %s440
        %s442 = sand.u32 %s65, 1
        %s443 = smul.addr %s442, 8
        %s444 = scalar_lea.vmem [#allocation5], %s443
        %p445 = pneg %p78
        %p446 = pneg %p75
        %s447 = sand.u32 %s31, 1
        %s448 = scalar_lea.sflag [#allocation6], %s447
        %s449 = sand.u32 %s91, 1
        %s450 = smul.addr %s449, 8
        %s451 = scalar_lea.vmem [#allocation7], %s450
        %p452 = pneg %p104
        %p453 = pneg %p101
        %p454 = pneg %p125
        %p455 = pneg %p122
        %p456 = pneg %p146
        %p457 = pneg %p143
        %p458 = pneg %p167
        %p459 = pneg %p164
        %p460 = pneg %p188
        %p461 = pneg %p185
        %p462 = pneg %p209
        %p463 = pneg %p206
        %p464 = pneg %p230
        %p465 = pneg %p227
        %p466 = pneg %p256
        %p467 = pneg %p253
        %s468 = sand.u32 %s243, 1
        %s469 = scalar_lea.sflag [#allocation4], %s468
        %s470 = sand.u32 %s243, 1
        %s471 = smul.addr %s470, 8
        %s472 = scalar_lea.vmem [#allocation13], %s471
        %v473 = vld [vmem:[%s3] sm:$0xff]
        %v474 = vld [vmem:[%s3 + $0x8] sm:$0xff]
        %v475 = vld [vmem:[%s3 + $0x10] sm:$0xff]
        %v476 = vld [vmem:[%s3 + $0x18] sm:$0xff]
        %s477 = scalar_lea.vmem %s3, 32
        %v478 = vld [vmem:[%s477] sm:$0xff]
        %v479 = vld [vmem:[%s477 + $0x8] sm:$0xff]
        %v480 = vld [vmem:[%s477 + $0x10] sm:$0xff]
        %v481 = vld [vmem:[%s477 + $0x18] sm:$0xff]
        %s482 = scalar_lea.vmem %s3, 64
        %v483 = vld [vmem:[%s482] sm:$0xff]
        %v484 = vld [vmem:[%s482 + $0x8] sm:$0xff]
        %v485 = vld [vmem:[%s482 + $0x10] sm:$0xff]
        %v486 = vld [vmem:[%s482 + $0x18] sm:$0xff]
        %v487 = vld [vmem:[#allocation10] sm:$0xff]
        %v488 = vld [vmem:[#allocation10 + $0x8] sm:$0xff]
        %v489 = vld [vmem:[#allocation10 + $0x10] sm:$0xff]
        %v490 = vld [vmem:[#allocation10 + $0x18] sm:$0xff]
        %v491 = vld [vmem:[#allocation8] sm:$0x1]
        %v492 = vld [vmem:[#allocation8 + $0x1] sm:$0x1]
        %v493 = vld [vmem:[#allocation8 + $0x2] sm:$0x1]
        %v494 = vld [vmem:[%s6] sm:$0x1]
        %v495 = vld [vmem:[%s7] sm:$0xff]
        %v496 = vld [vmem:[%s7 + $0x8] sm:$0xff]
        %v497 = vld [vmem:[%s7 + $0x10] sm:$0xff]
        %v498 = vld [vmem:[%s7 + $0x18] sm:$0xff]
        %v499 = vld [vmem:[%s7 + $0x20] sm:$0xff]
        %v500 = vld [vmem:[%s7 + $0x28] sm:$0xff]
        %v501 = vld [vmem:[%s7 + $0x30] sm:$0xff]
        %v502 = vld [vmem:[%s7 + $0x38] sm:$0xff]
        %v503 = vld [vmem:[#allocation11] sm:$0xff]
        %v504 = vld [vmem:[#allocation11 + $0x8] sm:$0xff]
        %v505 = vld [vmem:[#allocation11 + $0x10] sm:$0xff]
        %v506 = vld [vmem:[#allocation11 + $0x18] sm:$0xff]
        %v507 = vld [vmem:[#allocation11 + $0x20] sm:$0xff]
        %v508 = vld [vmem:[#allocation11 + $0x28] sm:$0xff]
        %v509 = vld [vmem:[#allocation11 + $0x30] sm:$0xff]
        %v510 = vld [vmem:[#allocation11 + $0x38] sm:$0xff]
        %v511 = vld [vmem:[%s392] sm:$0xff]
        %v512 = vld [vmem:[%s402] sm:$0xff]
        %v513 = vld [vmem:[%s412] sm:$0xff]
        %v514 = vperm.slane %v491, 0
        %vm515 = vcmask 261120
        %v517 = vsel %vm515, %v511, 0
        %519 = vmatpush.msra.mxu0 0.0
        %520 = vmatpush.msra.mxu0 0.0
        %521 = vmatpush.msra.mxu0 0.0
        %522 = vmatpush.msra.mxu0 0.0
        %523 = vmatpush.msra.mxu0 0.0
        %524 = vmatpush.msra.mxu0 0.0
        %525 = vmatpush.msra.mxu0 0.0
        %526 = vmatpush.msra.mxu0 0.0
        %527 = vmatpush.msra.mxu0 0.0
        %528 = vmatpush.msra.mxu0 0.0
        %529 = vmatpush.msra.mxu0 0.0
        %530 = vmatpush.msra.mxu0 0.0
        %531 = vmatpush.msra.mxu0 %v476
        %532 = vmatpush.msra.mxu0 %v475
        %533 = vmatpush.msra.mxu0 %v474
        %534 = vmatpush.msra.mxu0 %v473
        %535 = vmatmul.f32.gmra.mxu0 %v517
        %v536 = vpop.f32.mrf.mxu0
        %v537 = vadd.f32 %v514, %v536
        %538 = vdwg.mxu0
        %v539 = vperm.slane %v492, 0
        %v541 = vsel %vm515, %v512, 0
        %543 = vmatpush.msra.mxu0 0.0
        %544 = vmatpush.msra.mxu0 0.0
        %545 = vmatpush.msra.mxu0 0.0
        %546 = vmatpush.msra.mxu0 0.0
        %547 = vmatpush.msra.mxu0 0.0
        %548 = vmatpush.msra.mxu0 0.0
        %549 = vmatpush.msra.mxu0 0.0
        %550 = vmatpush.msra.mxu0 0.0
        %551 = vmatpush.msra.mxu0 0.0
        %552 = vmatpush.msra.mxu0 0.0
        %553 = vmatpush.msra.mxu0 0.0
        %554 = vmatpush.msra.mxu0 0.0
        %555 = vmatpush.msra.mxu0 %v481
        %556 = vmatpush.msra.mxu0 %v480
        %557 = vmatpush.msra.mxu0 %v479
        %558 = vmatpush.msra.mxu0 %v478
        %559 = vmatmul.f32.gmra.mxu0 %v541
        %v560 = vpop.f32.mrf.mxu0
        %v561 = vadd.f32 %v539, %v560
        %562 = vdwg.mxu0
        %v563 = vperm.slane %v493, 0
        %v565 = vsel %vm515, %v513, 0
        %567 = vmatpush.msra.mxu0 0.0
        %568 = vmatpush.msra.mxu0 0.0
        %569 = vmatpush.msra.mxu0 0.0
        %570 = vmatpush.msra.mxu0 0.0
        %571 = vmatpush.msra.mxu0 0.0
        %572 = vmatpush.msra.mxu0 0.0
        %573 = vmatpush.msra.mxu0 0.0
        %574 = vmatpush.msra.mxu0 0.0
        %575 = vmatpush.msra.mxu0 0.0
        %576 = vmatpush.msra.mxu0 0.0
        %577 = vmatpush.msra.mxu0 0.0
        %578 = vmatpush.msra.mxu0 0.0
        %579 = vmatpush.msra.mxu0 %v486
        %580 = vmatpush.msra.mxu0 %v485
        %581 = vmatpush.msra.mxu0 %v484
        %582 = vmatpush.msra.mxu0 %v483
        %583 = vmatmul.f32.gmra.mxu0 %v565
        %v584 = vpop.f32.mrf.mxu0
        %v585 = vadd.f32 %v563, %v584
        %586 = vdwg.mxu0
        %v587 = vmul.f32 %v561, %v495
        %v588 = vmul.f32 %v561, %v496
        %v589 = vmul.f32 %v561, %v497
        %v590 = vmul.f32 %v561, %v498
        %v591 = vmul.f32 %v561, %v499
        %v592 = vmul.f32 %v561, %v500
        %v593 = vmul.f32 %v561, %v501
        %v594 = vmul.f32 %v561, %v502
        %v595 = vmul.f32 %v585, %v495
        %v596 = vmul.f32 %v585, %v496
        %v597 = vmul.f32 %v585, %v497
        %v598 = vmul.f32 %v585, %v498
        %v599 = vmul.f32 %v585, %v499
        %v600 = vmul.f32 %v585, %v500
        %v601 = vmul.f32 %v585, %v501
        %v602 = vmul.f32 %v585, %v502
        %v604 = vsel %vm515, %v537, 0
        %v607 = vsel %vm515, %v587, 0
        %v610 = vsel %vm515, %v588, 0
        %v613 = vsel %vm515, %v589, 0
        %v616 = vsel %vm515, %v590, 0
        %v619 = vsel %vm515, %v591, 0
        %v622 = vsel %vm515, %v592, 0
        %v625 = vsel %vm515, %v593, 0
        %v628 = vsel %vm515, %v594, 0
        %630 = vmatpush.xpose.msra.mxu0 0.0
        %631 = vmatpush.xpose.msra.mxu0 0.0
        %632 = vmatpush.xpose.msra.mxu0 0.0
        %633 = vmatpush.xpose.msra.mxu0 0.0
        %634 = vmatpush.xpose.msra.mxu0 0.0
        %635 = vmatpush.xpose.msra.mxu0 0.0
        %636 = vmatpush.xpose.msra.mxu0 0.0
        %637 = vmatpush.xpose.msra.mxu0 0.0
        %638 = vmatpush.xpose.msra.mxu0 %v628
        %639 = vmatpush.xpose.msra.mxu0 %v625
        %640 = vmatpush.xpose.msra.mxu0 %v622
        %641 = vmatpush.xpose.msra.mxu0 %v619
        %642 = vmatpush.xpose.msra.mxu0 %v616
        %643 = vmatpush.xpose.msra.mxu0 %v613
        %644 = vmatpush.xpose.msra.mxu0 %v610
        %645 = vmatpush.xpose.msra.mxu0 %v607
        %646 = vmatmul.f32.gmra.mxu0 %v604
        %v647 = vpop.f32.mrf.mxu0
        %v648 = vadd.f32 0.0, %v647
        %649 = vdwg.mxu0
        %vm650 = vcmask 523264
        %v651 = vsel %vm650, %v648, -inf
        %652 = vmax.xlane.f32.xlu0 %v651
        %v653 = vpop.xlane.xlu0 %652
        %v654 = vsub.f32 %v648, %v653
        %v655 = vmul.f32 %v654, 1.442695
        %v656 = vpow.pop %v655
        %v658 = vsel %vm650, %v656, 0
        %660 = vmatpush.msra.mxu0 0.0
        %661 = vmatpush.msra.mxu0 0.0
        %662 = vmatpush.msra.mxu0 0.0
        %663 = vmatpush.msra.mxu0 0.0
        %664 = vmatpush.msra.mxu0 0.0
        %665 = vmatpush.msra.mxu0 0.0
        %666 = vmatpush.msra.mxu0 0.0
        %667 = vmatpush.msra.mxu0 0.0
        %668 = vmatpush.msra.mxu0 %v510
        %669 = vmatpush.msra.mxu0 %v509
        %670 = vmatpush.msra.mxu0 %v508
        %671 = vmatpush.msra.mxu0 %v507
        %672 = vmatpush.msra.mxu0 %v506
        %673 = vmatpush.msra.mxu0 %v505
        %674 = vmatpush.msra.mxu0 %v504
        %675 = vmatpush.msra.mxu0 %v503
        %676 = vmatmul.f32.gmra.mxu0 %v658
        %v677 = vpop.f32.mrf.mxu0
        %v678 = vadd.f32 0.0, %v677
        %679 = vdwg.mxu0
        %v680 = vrcp.pop %v678
        %v681 = vmul.f32 %v678, %v680
        %v682 = vsub.f32 1.0, %v681
        %v683 = vmul.f32 %v680, %v682
        %v684 = vadd.f32 %v680, %v683
        %vm685 = vweird.f32 %v678
        %vm686 = vweird.f32 %v680
        %vm687 = vmor %vm685, %vm686
        %v688 = vsel %vm687, %v680, %v684
        %v689 = vand.u32 2147483647, %v678
        %vm690 = vcmp.eq.f32.partialorder %v689, 8.507059e+37
        %v691 = vand.u32 %v678, 2147483648
        %v692 = vor.u32 1.1754944e-38, %v691
        %v693 = vsel %vm690, %v692, %v688
        %v694 = vmul.f32 %v656, %v693
        %v696 = vsel %vm650, %v694, 0
        %698 = vmatpush.msra.mxu0 0.0
        %699 = vmatpush.msra.mxu0 0.0
        %700 = vmatpush.msra.mxu0 0.0
        %701 = vmatpush.msra.mxu0 0.0
        %702 = vmatpush.msra.mxu0 0.0
        %703 = vmatpush.msra.mxu0 0.0
        %704 = vmatpush.msra.mxu0 0.0
        %705 = vmatpush.msra.mxu0 0.0
        %706 = vmatpush.msra.mxu0 %v602
        %707 = vmatpush.msra.mxu0 %v601
        %708 = vmatpush.msra.mxu0 %v600
        %709 = vmatpush.msra.mxu0 %v599
        %710 = vmatpush.msra.mxu0 %v598
        %711 = vmatpush.msra.mxu0 %v597
        %712 = vmatpush.msra.mxu0 %v596
        %713 = vmatpush.msra.mxu0 %v595
        %714 = vmatmul.f32.gmra.mxu0 %v696
        %v715 = vpop.f32.mrf.mxu0
        %v716 = vadd.f32 0.0, %v715
        %717 = vdwg.mxu0
        %v719 = vperm.slane %v494, 0
        %v722 = vsel %vm515, %v716, 0
        %724 = vmatpush.msra.mxu0 0.0
        %725 = vmatpush.msra.mxu0 0.0
        %726 = vmatpush.msra.mxu0 0.0
        %727 = vmatpush.msra.mxu0 0.0
        %728 = vmatpush.msra.mxu0 0.0
        %729 = vmatpush.msra.mxu0 0.0
        %730 = vmatpush.msra.mxu0 0.0
        %731 = vmatpush.msra.mxu0 0.0
        %732 = vmatpush.msra.mxu0 0.0
        %733 = vmatpush.msra.mxu0 0.0
        %734 = vmatpush.msra.mxu0 0.0
        %735 = vmatpush.msra.mxu0 0.0
        %736 = vmatpush.msra.mxu0 %v490
        %737 = vmatpush.msra.mxu0 %v489
        %738 = vmatpush.msra.mxu0 %v488
        %739 = vmatpush.msra.mxu0 %v487
        %740 = vmatmul.f32.gmra.mxu0 %v722
        %v741 = vpop.f32.mrf.mxu0
        %v742 = vadd.f32 %v719, %v741
        %743 = vdwg.mxu0
        %744 = vst [vmem:[%s472] sm:$0xff] %v742
        %s745 = sand.u32 %s243, 1
        %s746 = scalar_lea.sflag [#allocation4], %s745
        %s747 = sand.u32 %s243, 1
        %s748 = smul.addr %s747, 8
        %s749 = scalar_lea.vmem [#allocation13], %s748
        // Predicated region
        $region81: #{tpu_custom_call.1} parent=55 // pred_check
          %p750 = pneg %p253
        $region82: #{tpu_custom_call.1} parent=55 // pred_check_branch
          %752 = sbr.rel (%p750) target = $region84
        $region83: #{tpu_custom_call.1} parent=55 // pred_region
          %754 = vsyncadd %s746, 0
          %s755 = smul.addr %s31, 8
          %s756 = scalar_lea.hbm %s9, %s755
          %s758 = sshll.u32 %s749, 4
          %s759 = int_to_ptr.vmem [resolvable:$true] %s758
          %s760 = sshll.u32 %s756, 4
          %s761 = int_to_ptr.hbm [resolvable:$true] %s760
          %763 = dma.vmem_to_hbm [thread:$0]  %s759, 128, %s761, %s746
        $region84: #{tpu_custom_call.1} parent=55 // pred_fallthru
          _
      $region56: #{tpu_custom_call.1} parent=5 // pred_fallthru
        _
      %p764 = scmp.le.s32.totalorder 2, %s26
      // Predicated region
      $region85: #{tpu_custom_call.1} parent=5 // pred_check
        %p765 = pneg %p764
      $region86: #{tpu_custom_call.1} parent=5 // pred_check_branch
        %767 = sbr.rel (%p765) target = $region88
      $region87: #{tpu_custom_call.1} parent=5 // pred_region
        %s768 = ssub.s32 %s26, 2
        // Predicated region
        $region89: #{tpu_custom_call.1} parent=87 // pred_check
          %p769 = pneg %p259
        $region90: #{tpu_custom_call.1} parent=87 // pred_check_branch
          %771 = sbr.rel (%p769) target = $region92
        $region91: #{tpu_custom_call.1} parent=87 // pred_region
          %s772 = sand.u32 %s244, 1
          %s773 = scalar_lea.sflag [#allocation4], %s772
          %s774 = sand.u32 %s244, 1
          %s775 = smul.addr %s774, 8
          %s776 = scalar_lea.vmem [#allocation13], %s775
          %778 = dma.done %s773, 128
        $region92: #{tpu_custom_call.1} parent=87 // pred_fallthru
          _
      $region88: #{tpu_custom_call.1} parent=5 // pred_fallthru
        _
    $region6: #{tpu_custom_call.1} parent=1 // loop_footer
      %s30 = sadd.s32 1, %s26
    $region7: #{tpu_custom_call.1} parent=1 // loop_footer_branch
      %25 = sbr.rel target = $region3
    $region8: #{tpu_custom_call.1} parent=1 // loop_exit
      _
    %779 = vsyncpa [#allocation3], 1
    %s780 = scalar_lea.sflag [#allocation3], 1
    %781 = vsyncpa %s780, 1
    %782 = vsyncpa [#allocation6], 1
    %s783 = scalar_lea.sflag [#allocation6], 1
    %784 = vsyncpa %s783, 1
    %785 = vsyncpa [#allocation9], 1
    %786 = vsyncpa [#allocation12], 1
    %787 = vsyncpa [#allocation4], 1
    %s788 = scalar_lea.sflag [#allocation4], 1
    %789 = vsyncpa %s788, 1

</llo_original>
